<compile_context>
chip_gen: v7x
topology: tpu7x:2x2x1
jax: 0.10.0
libtpu: 0.0.40
codegen_flags: <defaults>
</compile_context>

<pallas_src>
import jax
import jax.numpy as jnp
from jax.experimental import pallas as pl
from jax.experimental.pallas import tpu as pltpu


def _round_up(x, m):
    return ((x + m - 1) // m) * m


def _pick_tk(d_pad, cap=2048):
    """Largest multiple of 128 that divides d_pad and is <= cap."""
    best = 128
    t = 128
    limit = min(d_pad, cap)
    while t <= limit:
        if d_pad % t == 0:
            best = t
        t += 128
    return best


def prepare_classifier_params(weight, bias):
    """One-time (per-model) padding + bf16 cast of the persistent parameters.

    weight : (D, N) float32
    bias   : (N,)   float32
    Returns (w_padded bf16 (D_pad, NP), b_padded f32 (1, NP)).
    """
    D, N = weight.shape
    D_pad = _round_up(D, 128)
    NP = _round_up(N, 128)
    w_p = jnp.zeros((D_pad, NP), jnp.bfloat16)
    w_p = w_p.at[:D, :N].set(weight.astype(jnp.bfloat16))
    b_p = jnp.zeros((1, NP), jnp.float32).at[0, :N].set(bias.astype(jnp.float32))
    return w_p, b_p


def _model_with_loss_kernel(num_classes, label_smoothing):
    """Tiled-K linear head -> masked softmax -> label-smoothed CE (log-softmax)."""

    def kernel(x_ref, w_ref, b_ref, lab_ref, probs_ref, loss_ref, acc_ref):
        k = pl.program_id(1)

        @pl.when(k == 0)
        def _():
            acc_ref[...] = jnp.zeros_like(acc_ref)

        # x arrives f32 (no wrapper-side bf16 copy); cast just before the MXU.
        acc_ref[...] += jnp.dot(
            x_ref[...].astype(jnp.bfloat16), w_ref[...],
            preferred_element_type=jnp.float32,
        )

        @pl.when(k == pl.num_programs(1) - 1)
        def _():
            logits = acc_ref[...] + b_ref[...]                    # (TM, NP) f32
            class_idx = jax.lax.broadcasted_iota(jnp.int32, logits.shape, 1)
            valid = class_idx < num_classes                       # mask padded lanes

            # Numerically stable softmax over the real classes only.
            masked = jnp.where(valid, logits, jnp.float32(-1e30))
            m = jnp.max(masked, axis=-1, keepdims=True)
            e = jnp.where(valid, jnp.exp(masked - m), 0.0)
            s = jnp.sum(e, axis=-1, keepdims=True)
            inv_s = pl.reciprocal(s, approx=True)                 # EUP slot
            probs_ref[...] = (e * inv_s).astype(probs_ref.dtype)

            # Label-smoothed CE from log-softmax (no log(probs) round trip).
            logp = (masked - m) - jnp.log(s)
            onehot = (class_idx == lab_ref[...]).astype(jnp.float32)
            q = onehot * (1.0 - label_smoothing) + label_smoothing / num_classes
            per_ex = -jnp.sum(jnp.where(valid, q * logp, 0.0),
                              axis=-1, keepdims=True)             # (TM, 1)
            # Lane-dense store (broadcast across 128 lanes; wrapper reads col 0).
            loss_ref[...] = jnp.broadcast_to(per_ex, loss_ref.shape)

    return kernel


def model_with_loss_forward(image_nchw, labels, w_padded, b_padded, *,
                            num_classes, label_smoothing):
    """JAX wrapper mirroring ModelWithLoss.forward for opt.loss == 'CE'.

    image_nchw : (B, C, H, W) float32 (NCHW, like PyTorch)
    labels     : (B,) int class ids
    w_padded   : (D_pad, NP) bf16, from prepare_classifier_params
    b_padded   : (1, NP) f32,  from prepare_classifier_params
    Returns (probs, loss, loss_stat) like the PyTorch module.
    """
    B = image_nchw.shape[0]
    x_flat = image_nchw.reshape(B, -1).astype(jnp.float32)
    D = x_flat.shape[1]
    D_pad, NP = w_padded.shape
    assert D_pad == _round_up(D, 128), "weight not prepared for this input width"

    # ---- tiled geometry ------------------------------------------------------
    TM = min(512, _round_up(B, 16))          # bf16 sublane packing; whole batch if it fits
    M_pad = _round_up(B, TM)                 # (B <= 512 -> single batch tile -> one weight pass)
    TK = _pick_tk(D_pad)                     # 128-multiple divisor of D_pad, no dead K
    grid = (M_pad // TM, D_pad // TK)        # reduction axis last

    # ---- minimal per-call padding (f32, only if shapes require it) ----------
    if (M_pad, D_pad) != (B, D):
        x_in = jnp.pad(x_flat, ((0, M_pad - B), (0, D_pad - D)))
    else:
        x_in = x_flat
    lab_in = labels.astype(jnp.int32).reshape(B, 1)
    if M_pad != B:
        lab_in = jnp.pad(lab_in, ((0, M_pad - B), (0, 0)))

    cost = pl.CostEstimate(
        flops=2 * M_pad * D_pad * NP,
        transcendentals=M_pad * NP,
        bytes_accessed=(x_in.size * 4 + w_padded.size * 2
                        + M_pad * NP * 4 + M_pad * 128 * 4),
    )

    probs_pad, loss_pe = pl.pallas_call(
        _model_with_loss_kernel(num_classes, label_smoothing),
        out_shape=(
            jax.ShapeDtypeStruct((M_pad, NP), jnp.float32),   # softmax probs (padded)
            jax.ShapeDtypeStruct((M_pad, 128), jnp.float32),  # per-example loss (lane-dense)
        ),
        grid_spec=pltpu.PrefetchScalarGridSpec(
            num_scalar_prefetch=0,
            grid=grid,
            in_specs=[
                pl.BlockSpec((TM, TK), lambda i, k: (i, k)),   # x tile (f32)
                pl.BlockSpec((TK, NP), lambda i, k: (k, 0)),   # weight tile (bf16)
                pl.BlockSpec((1, NP), lambda i, k: (0, 0)),    # bias
                pl.BlockSpec((TM, 1), lambda i, k: (i, 0)),    # labels
            ],
            out_specs=(
                pl.BlockSpec((TM, NP), lambda i, k: (i, 0)),   # probs (resident over k)
                pl.BlockSpec((TM, 128), lambda i, k: (i, 0)),  # per-example loss
            ),
            scratch_shapes=[pltpu.VMEM((TM, NP), jnp.float32)],  # f32 accumulator
        ),
        compiler_params=pltpu.CompilerParams(
            dimension_semantics=("parallel", "arbitrary"),
            vmem_limit_bytes=48 * 1024 * 1024,   # <= v7x 64 MiB physical; ample on v5e/v6e
        ),
        cost_estimate=cost,
    )(x_in, w_padded, b_padded, lab_in)

    probs = probs_pad[:B, :num_classes]
    loss = jnp.mean(loss_pe[:B, 0])
    loss_stat = {"label_CE": loss}
    return probs, loss, loss_stat


if __name__ == "__main__":
    # Small shapes consistent with the module's forward.
    B, C, H, W = 8, 4, 16, 16          # batch, channels, spatial (NCHW)
    NUM_CLASSES = 10
    D = C * H * W
    LABEL_SMOOTHING = 1.0 / B          # opt.label_smoothing -> 1 / batch_size

    key = jax.random.PRNGKey(0)
    k_img, k_w, k_b, k_lab = jax.random.split(key, 4)

    image = jax.random.normal(k_img, (B, C, H, W), dtype=jnp.float32)
    weight = jax.random.normal(k_w, (D, NUM_CLASSES), dtype=jnp.float32) * 0.02
    bias = jax.random.normal(k_b, (NUM_CLASSES,), dtype=jnp.float32) * 0.01
    labels = jax.random.randint(k_lab, (B,), 0, NUM_CLASSES, dtype=jnp.int32)

    # One-time parameter prep (persistent, outside the per-call path).
    w_padded, b_padded = prepare_classifier_params(weight, bias)

    probs, loss, loss_stat = model_with_loss_forward(
        image, labels, w_padded, b_padded,
        num_classes=NUM_CLASSES, label_smoothing=LABEL_SMOOTHING,
    )
    jax.block_until_ready((probs, loss))

    # Pure-JAX reference (matching bf16 matmul operands / f32 accumulation).
    x_flat = image.reshape(B, -1)
    logits_ref = jnp.dot(
        x_flat.astype(jnp.bfloat16), weight.astype(jnp.bfloat16),
        preferred_element_type=jnp.float32,
    ) + bias
    probs_ref = jax.nn.softmax(logits_ref, axis=-1)
    logp_ref = jax.nn.log_softmax(logits_ref, axis=-1)
    onehot = jax.nn.one_hot(labels, NUM_CLASSES, dtype=jnp.float32)
    q = onehot * (1.0 - LABEL_SMOOTHING) + LABEL_SMOOTHING / NUM_CLASSES
    loss_ref = jnp.mean(-jnp.sum(q * logp_ref, axis=-1))

    assert probs.shape == (B, NUM_CLASSES)
    # probs tolerance accounts for the approx (EUP) reciprocal in the kernel.
    assert jnp.allclose(probs, probs_ref, atol=2e-3), "probs mismatch"
    assert jnp.allclose(loss, loss_ref, atol=1e-4), "loss mismatch"
    assert "label_CE" in loss_stat

    print("KERNEL_OK")
</pallas_src>

<mosaic_0001>
module attributes {stable_mosaic.version = 11 : i64} {
  func.func @kernel(%arg0: i32, %arg1: i32, %arg2: memref<16x1024xf32, #tpu.memory_space<vmem>>, %arg3: memref<1024x128xbf16, #tpu.memory_space<vmem>>, %arg4: memref<1x128xf32, #tpu.memory_space<vmem>>, %arg5: memref<16x1xi32, #tpu.memory_space<vmem>>, %arg6: memref<16x128xf32, #tpu.memory_space<vmem>>, %arg7: memref<16x128xf32, #tpu.memory_space<vmem>>, %arg8: memref<16x128xf32, #tpu.memory_space<vmem>>) attributes {dimension_semantics = [#tpu.dimension_semantics<parallel>, #tpu.dimension_semantics<arbitrary>], iteration_bounds = array<i64: 1, 1>, scalar_prefetch = 0 : i64, scratch_operands = 1 : i64, tpu.core_type = #tpu.core_type<tc>, window_params = [{transform_indices = @transform_0, window_bounds = array<i64: 16, 1024>}, {transform_indices = @transform_1, window_bounds = array<i64: 1024, 128>}, {pipeline_mode = #tpu.pipeline_mode<synchronous>, transform_indices = @transform_2, window_bounds = array<i64: 1, 128>}, {transform_indices = @transform_3, window_bounds = array<i64: 16, 1>}, {transform_indices = @transform_4, window_bounds = array<i64: 16, 128>}, {transform_indices = @transform_5, window_bounds = array<i64: 16, 128>}]} {
    %c0_i32 = arith.constant 0 : i32
    %0 = arith.cmpi eq, %arg1, %c0_i32 : i32
    %1 = arith.extui %0 : i1 to i32
    %c0_i32_0 = arith.constant 0 : i32
    %2 = arith.cmpi ne, %1, %c0_i32_0 : i32
    scf.if %2 {
      %cst_10 = arith.constant 0.000000e+00 : f32
      %13 = vector.broadcast %cst_10 : f32 to vector<16x128xf32>
      %c0_11 = arith.constant 0 : index
      %c0_12 = arith.constant 0 : index
      %14 = vector.load %arg8[%c0_11, %c0_12] : memref<16x128xf32, #tpu.memory_space<vmem>>, vector<16x128xf32>
      tpu.vector_store %arg8[%c0_11, %c0_12], %13 {strides = array<i32>} : memref<16x128xf32, #tpu.memory_space<vmem>>, vector<16x128xf32>,
    } else {
    }
    %c0 = arith.constant 0 : index
    %c0_1 = arith.constant 0 : index
    %3 = vector.load %arg8[%c0, %c0_1] : memref<16x128xf32, #tpu.memory_space<vmem>>, vector<16x128xf32>
    %c0_2 = arith.constant 0 : index
    %c0_3 = arith.constant 0 : index
    %4 = vector.load %arg2[%c0_2, %c0_3] : memref<16x1024xf32, #tpu.memory_space<vmem>>, vector<16x1024xf32>
    %5 = arith.truncf %4 : vector<16x1024xf32> to vector<16x1024xbf16>
    %c0_4 = arith.constant 0 : index
    %c0_5 = arith.constant 0 : index
    %6 = vector.load %arg3[%c0_4, %c0_5] : memref<1024x128xbf16, #tpu.memory_space<vmem>>, vector<1024x128xbf16>
    %cst = arith.constant dense<0.000000e+00> : vector<16x128xf32>
    %7 = tpu.matmul %5, %6, %cst {dimension_numbers = #tpu.dot_dimension_numbers<[1], [0], [0], [1], [0, 0, 1, 1], [], []>} : vector<16x1024xbf16>, vector<1024x128xbf16>, vector<16x128xf32> -> vector<16x128xf32>
    %8 = arith.addf %3, %7 : vector<16x128xf32>
    %c0_6 = arith.constant 0 : index
    %c0_7 = arith.constant 0 : index
    %9 = vector.load %arg8[%c0_6, %c0_7] : memref<16x128xf32, #tpu.memory_space<vmem>>, vector<16x128xf32>
    tpu.vector_store %arg8[%c0_6, %c0_7], %8 {strides = array<i32>} : memref<16x128xf32, #tpu.memory_space<vmem>>, vector<16x128xf32>,
    %c0_i32_8 = arith.constant 0 : i32
    %10 = arith.cmpi eq, %arg1, %c0_i32_8 : i32
    %11 = arith.extui %10 : i1 to i32
    %c0_i32_9 = arith.constant 0 : i32
    %12 = arith.cmpi ne, %11, %c0_i32_9 : i32
    scf.if %12 {
      %c0_10 = arith.constant 0 : index
      %c0_11 = arith.constant 0 : index
      %13 = vector.load %arg8[%c0_10, %c0_11] : memref<16x128xf32, #tpu.memory_space<vmem>>, vector<16x128xf32>
      %c0_12 = arith.constant 0 : index
      %c0_13 = arith.constant 0 : index
      %14 = vector.load %arg4[%c0_12, %c0_13] : memref<1x128xf32, #tpu.memory_space<vmem>>, vector<1x128xf32>
      %15 = vector.broadcast %14 : vector<1x128xf32> to vector<16x128xf32>
      %16 = arith.addf %13, %15 : vector<16x128xf32>
      %17 = tpu.iota {dimensions = array<i32: 1>} : vector<16x128xi32>
      %c10_i32 = arith.constant 10 : i32
      %18 = vector.broadcast %c10_i32 : i32 to vector<16x128xi32>
      %19 = arith.cmpi slt, %17, %18 : vector<16x128xi32>
      %cst_14 = arith.constant -1.000000e+30 : f32
      %20 = vector.broadcast %cst_14 : f32 to vector<16x128xf32>
      %21 = arith.select %19, %16, %20 : vector<16x128xi1>, vector<16x128xf32>
      %cst_15 = arith.constant dense<0xFF800000> : vector<16xf32>
      %22 = vector.multi_reduction <maximumf>, %21, %cst_15 [1] : vector<16x128xf32> to vector<16xf32>
      %23 = vector.shape_cast %22 : vector<16xf32> to vector<16x1xf32>
      %24 = vector.broadcast %23 : vector<16x1xf32> to vector<16x128xf32>
      %25 = arith.subf %21, %24 : vector<16x128xf32>
      %26 = math.exp %25 : vector<16x128xf32>
      %cst_16 = arith.constant 0.000000e+00 : f32
      %27 = vector.broadcast %cst_16 : f32 to vector<16x128xf32>
      %28 = arith.select %19, %26, %27 : vector<16x128xi1>, vector<16x128xf32>
      %cst_17 = arith.constant dense<0.000000e+00> : vector<16xf32>
      %29 = vector.multi_reduction <add>, %28, %cst_17 [1] : vector<16x128xf32> to vector<16xf32>
      %30 = vector.shape_cast %29 : vector<16xf32> to vector<16x1xf32>
      %31 = tpu.reciprocal %30 {approx = true} : vector<16x1xf32> -> vector<16x1xf32>
      %32 = vector.broadcast %31 : vector<16x1xf32> to vector<16x128xf32>
      %33 = arith.mulf %28, %32 : vector<16x128xf32>
      %c0_18 = arith.constant 0 : index
      %c0_19 = arith.constant 0 : index
      %34 = vector.load %arg6[%c0_18, %c0_19] : memref<16x128xf32, #tpu.memory_space<vmem>>, vector<16x128xf32>
      tpu.vector_store %arg6[%c0_18, %c0_19], %33 {strides = array<i32>} : memref<16x128xf32, #tpu.memory_space<vmem>>, vector<16x128xf32>,
      %35 = vector.broadcast %23 : vector<16x1xf32> to vector<16x128xf32>
      %36 = arith.subf %21, %35 : vector<16x128xf32>
      %37 = math.log %30 : vector<16x1xf32>
      %38 = vector.broadcast %37 : vector<16x1xf32> to vector<16x128xf32>
      %39 = arith.subf %36, %38 : vector<16x128xf32>
      %c0_20 = arith.constant 0 : index
      %c0_21 = arith.constant 0 : index
      %40 = vector.load %arg5[%c0_20, %c0_21] : memref<16x1xi32, #tpu.memory_space<vmem>>, vector<16x1xi32>
      %41 = vector.broadcast %40 : vector<16x1xi32> to vector<16x128xi32>
      %42 = arith.cmpi eq, %17, %41 : vector<16x128xi32>
      %43 = arith.extui %42 : vector<16x128xi1> to vector<16x128xi32>
      %44 = arith.sitofp %43 : vector<16x128xi32> to vector<16x128xf32>
      %cst_22 = arith.constant 8.750000e-01 : f32
      %45 = vector.broadcast %cst_22 : f32 to vector<16x128xf32>
      %46 = arith.mulf %44, %45 : vector<16x128xf32>
      %cst_23 = arith.constant 1.250000e-02 : f32
      %47 = vector.broadcast %cst_23 : f32 to vector<16x128xf32>
      %48 = arith.addf %46, %47 : vector<16x128xf32>
      %49 = arith.mulf %48, %39 : vector<16x128xf32>
      %cst_24 = arith.constant 0.000000e+00 : f32
      %50 = vector.broadcast %cst_24 : f32 to vector<16x128xf32>
      %51 = arith.select %19, %49, %50 : vector<16x128xi1>, vector<16x128xf32>
      %cst_25 = arith.constant dense<0.000000e+00> : vector<16xf32>
      %52 = vector.multi_reduction <add>, %51, %cst_25 [1] : vector<16x128xf32> to vector<16xf32>
      %53 = vector.shape_cast %52 : vector<16xf32> to vector<16x1xf32>
      %cst_26 = arith.constant 0.000000e+00 : f32
      %54 = vector.broadcast %cst_26 : f32 to vector<16x1xf32>
      %55 = arith.subf %54, %53 : vector<16x1xf32>
      %56 = vector.shape_cast %55 : vector<16x1xf32> to vector<16x1xf32>
      %57 = vector.broadcast %56 : vector<16x1xf32> to vector<16x128xf32>
      %c0_27 = arith.constant 0 : index
      %c0_28 = arith.constant 0 : index
      %58 = vector.load %arg7[%c0_27, %c0_28] : memref<16x128xf32, #tpu.memory_space<vmem>>, vector<16x128xf32>
      tpu.vector_store %arg7[%c0_27, %c0_28], %57 {strides = array<i32>} : memref<16x128xf32, #tpu.memory_space<vmem>>, vector<16x128xf32>,
    } else {
    }
    return
  }
  func.func @transform_0(%arg0: i32, %arg1: i32) -> (i32, i32) {
    %c0_i32 = arith.constant 0 : i32
    return %arg0, %arg1 : i32, i32
  }
  func.func @transform_1(%arg0: i32, %arg1: i32) -> (i32, i32) {
    %c0_i32 = arith.constant 0 : i32
    %c0_i32_0 = arith.constant 0 : i32
    return %arg1, %c0_i32 : i32, i32
  }
  func.func @transform_2(%arg0: i32, %arg1: i32) -> (i32, i32) {
    %c0_i32 = arith.constant 0 : i32
    %c0_i32_0 = arith.constant 0 : i32
    %c0_i32_1 = arith.constant 0 : i32
    return %c0_i32, %c0_i32_0 : i32, i32
  }
  func.func @transform_3(%arg0: i32, %arg1: i32) -> (i32, i32) {
    %c0_i32 = arith.constant 0 : i32
    %c0_i32_0 = arith.constant 0 : i32
    return %arg0, %c0_i32 : i32, i32
  }
  func.func @transform_4(%arg0: i32, %arg1: i32) -> (i32, i32) {
    %c0_i32 = arith.constant 0 : i32
    %c0_i32_0 = arith.constant 0 : i32
    return %arg0, %c0_i32 : i32, i32
  }
  func.func @transform_5(%arg0: i32, %arg1: i32) -> (i32, i32) {
    %c0_i32 = arith.constant 0 : i32
    %c0_i32_0 = arith.constant 0 : i32
    return %arg0, %c0_i32 : i32, i32
  }
}

</mosaic_0001>

<llo_original>
// kernel: tpu_custom_call.1
$region0: #{tpu_custom_call.1}
  #allocation0 [shape = 'u32[]', space=smem, size = 0x4, offset = 0x4, fixed_abs, tag = 'smem constant byte address 0x4 - core index']
  #allocation1 [shape = 'u32[144,128]{1,0:T(1,128)}', space=vmem, size = 0x12000, scoped, tag = 'internal scratch']
  #allocation2 [shape = 'f32[16,128]{1,0:T(8,128)}', space=vmem, size = 0x2000, scoped, tag = 'scratch operand']
  %s0 = inlined_call_operand.hbm [shape: f32[16,1024], index: 0, kind: input, shape index: {}]
  %s1 = inlined_call_operand.hbm [shape: bf16[1024,128], index: 1, kind: input, shape index: {}]
  %s2 = inlined_call_operand.vmem [shape: f32[1,128], index: 2, kind: input, shape index: {}]
  %s3 = inlined_call_operand.vmem [shape: s32[16,1], index: 3, kind: input, shape index: {}]
  %s4 = inlined_call_operand.hbm [shape: f32[16,128], index: 4, kind: output, shape index: {0}]
  %s5 = inlined_call_operand.hbm [shape: f32[16,128], index: 5, kind: output, shape index: {1}]
  %6 = xla_tuple %s4, %s5
  %s7 = sld [smem:[#allocation0]]
  $region50: #{tpu_custom_call.1} parent=0
    _
  %s9 = ssub.s32 1, %s7
  %s10 = scalar_select 0, %s9, %s7
  $region1: #{tpu_custom_call.1} parent=0
    #allocation3 [shape = 'u8[65536]{0}', space=vmem, size = 0x10000, scoped, tag = 'input window, operand 0, single buffered']
    #allocation4 [shape = 's32[1]{0}', space=sflag, size = 0x4, scoped, tag = 'scoped memory for tpu_custom_call.1']
    #allocation5 [shape = 's32[1]{0}', space=sflag, size = 0x4, scoped, tag = 'scoped memory for tpu_custom_call.1']
    #allocation6 [shape = 'u8[262144]{0}', space=vmem, size = 0x40000, scoped, tag = 'input window, operand 1, single buffered']
    #allocation7 [shape = 's32[1]{0}', space=sflag, size = 0x4, scoped, tag = 'scoped memory for tpu_custom_call.1']
    #allocation8 [shape = 'u8[8192]{0}', space=vmem, size = 0x2000, scoped, tag = 'output window, operand 0, single buffered']
    #allocation9 [shape = 'u8[8192]{0}', space=vmem, size = 0x2000, scoped, tag = 'output window, operand 1, single buffered']
    #allocation10 [shape = 's32[1]{0}', space=sflag, size = 0x4, scoped, tag = 'scoped memory for tpu_custom_call.1']
    %11 = vsyncpa [#allocation4], 0
    %12 = vsyncpa [#allocation7], 0
    %13 = vsyncpa [#allocation5], 0
    %14 = vsyncpa [#allocation10], 0
    // Predicated region
    $region2: #{tpu_custom_call.1} parent=1 // pred_check
      _
    $region3: #{tpu_custom_call.1} parent=1 // pred_check_branch
      %16 = sbr.rel (0) target = $region5
    $region4: #{tpu_custom_call.1} parent=1 // pred_region
      %s18 = ssub.s32 2048, 2048
      %19 = vsyncadd [#allocation4], %s18
      %s20 = sshll.u32 [#allocation3], 4
      %s21 = int_to_ptr.vmem [resolvable:$true] %s20
      %26 = dma.hbm_to_vmem [thread:$0]  %s0, 2048, %s21, [#allocation4], 1024, 1024, 64
    $region5: #{tpu_custom_call.1} parent=1 // pred_fallthru
      _
    // Predicated region
    $region6: #{tpu_custom_call.1} parent=1 // pred_check
      _
    $region7: #{tpu_custom_call.1} parent=1 // pred_check_branch
      %28 = sbr.rel (0) target = $region9
    $region8: #{tpu_custom_call.1} parent=1 // pred_region
      %s30 = ssub.s32 8192, 8192
      %31 = vsyncadd [#allocation7], %s30
      %s32 = sshll.u32 [#allocation6], 4
      %s33 = int_to_ptr.vmem [resolvable:$true] %s32
      %38 = dma.hbm_to_vmem [thread:$0]  %s1, 8192, %s33, [#allocation7], 64, 64, 4
    $region9: #{tpu_custom_call.1} parent=1 // pred_fallthru
      _
    // Predicated region
    $region10: #{tpu_custom_call.1} parent=1 // pred_check
      _
    $region11: #{tpu_custom_call.1} parent=1 // pred_check_branch
      %40 = sbr.rel (0) target = $region13
    $region12: #{tpu_custom_call.1} parent=1 // pred_region
      _
    $region13: #{tpu_custom_call.1} parent=1 // pred_fallthru
      _
    // Predicated region
    $region14: #{tpu_custom_call.1} parent=1 // pred_check
      _
    $region15: #{tpu_custom_call.1} parent=1 // pred_check_branch
      %42 = sbr.rel (0) target = $region17
    $region16: #{tpu_custom_call.1} parent=1 // pred_region
      _
    $region17: #{tpu_custom_call.1} parent=1 // pred_fallthru
      _
    // Predicated region
    $region18: #{tpu_custom_call.1} parent=1 // pred_check
      _
    $region19: #{tpu_custom_call.1} parent=1 // pred_check_branch
      %44 = sbr.rel (0) target = $region21
    $region20: #{tpu_custom_call.1} parent=1 // pred_region
      %45 = dma.done [#allocation4], 2048
    $region21: #{tpu_custom_call.1} parent=1 // pred_fallthru
      _
    // Predicated region
    $region22: #{tpu_custom_call.1} parent=1 // pred_check
      _
    $region23: #{tpu_custom_call.1} parent=1 // pred_check_branch
      %47 = sbr.rel (0) target = $region25
    $region24: #{tpu_custom_call.1} parent=1 // pred_region
      %48 = dma.done [#allocation7], 8192
    $region25: #{tpu_custom_call.1} parent=1 // pred_fallthru
      _
    %p50 = scmp.eq.s32.totalorder 0, 0
    // Predicated region
    $region26: #{tpu_custom_call.1} parent=1 // pred_check
      %p51 = pneg %p50
    $region27: #{tpu_custom_call.1} parent=1 // pred_check_branch
      %53 = sbr.rel (%p51) target = $region29
    $region28: #{tpu_custom_call.1} parent=1 // pred_region
      %54 = vst [vmem:[#allocation2] sm:$0xff] 0.0
      %55 = vst [vmem:[#allocation2 + $0x8] sm:$0xff] 0.0
    $region29: #{tpu_custom_call.1} parent=1 // pred_fallthru
      _
    %v56 = vld [vmem:[#allocation2] sm:$0xff]
    %v57 = vld [vmem:[#allocation2 + $0x8] sm:$0xff]
    %v58 = vld [vmem:[#allocation3] sm:$0xff]
    %v59 = vld [vmem:[#allocation3 + $0x8] sm:$0xff]
    %v60 = vld [vmem:[#allocation3 + $0x10] sm:$0xff]
    %v61 = vld [vmem:[#allocation3 + $0x18] sm:$0xff]
    %v62 = vld [vmem:[#allocation3 + $0x20] sm:$0xff]
    %v63 = vld [vmem:[#allocation3 + $0x28] sm:$0xff]
    %v64 = vld [vmem:[#allocation3 + $0x30] sm:$0xff]
    %v65 = vld [vmem:[#allocation3 + $0x38] sm:$0xff]
    %v66 = vld [vmem:[#allocation3 + $0x40] sm:$0xff]
    %v67 = vld [vmem:[#allocation3 + $0x48] sm:$0xff]
    %v68 = vld [vmem:[#allocation3 + $0x50] sm:$0xff]
    %v69 = vld [vmem:[#allocation3 + $0x58] sm:$0xff]
    %v70 = vld [vmem:[#allocation3 + $0x60] sm:$0xff]
    %v71 = vld [vmem:[#allocation3 + $0x68] sm:$0xff]
    %v72 = vld [vmem:[#allocation3 + $0x70] sm:$0xff]
    %v73 = vld [vmem:[#allocation3 + $0x78] sm:$0xff]
    %v74 = vpack.c.bf16 %v66, %v58
    %v75 = vpack.c.bf16 %v67, %v59
    %v76 = vpack.c.bf16 %v68, %v60
    %v77 = vpack.c.bf16 %v69, %v61
    %v78 = vpack.c.bf16 %v70, %v62
    %v79 = vpack.c.bf16 %v71, %v63
    %v80 = vpack.c.bf16 %v72, %v64
    %v81 = vpack.c.bf16 %v73, %v65
    %v82 = vld [vmem:[#allocation6] sm:$0xf]
    %v83 = vld [vmem:[#allocation6 + $0x4] sm:$0xf]
    %v84 = vld [vmem:[#allocation6 + $0x8] sm:$0xf]
    %v85 = vld [vmem:[#allocation6 + $0xc] sm:$0xf]
    %v86 = vld [vmem:[#allocation6 + $0x10] sm:$0xf]
    %v87 = vld [vmem:[#allocation6 + $0x14] sm:$0xf]
    %v88 = vld [vmem:[#allocation6 + $0x18] sm:$0xf]
    %v89 = vld [vmem:[#allocation6 + $0x1c] sm:$0xf]
    %v90 = vld [vmem:[#allocation6 + $0x20] sm:$0xf]
    %v91 = vld [vmem:[#allocation6 + $0x24] sm:$0xf]
    %v92 = vld [vmem:[#allocation6 + $0x28] sm:$0xf]
    %v93 = vld [vmem:[#allocation6 + $0x2c] sm:$0xf]
    %v94 = vld [vmem:[#allocation6 + $0x30] sm:$0xf]
    %v95 = vld [vmem:[#allocation6 + $0x34] sm:$0xf]
    %v96 = vld [vmem:[#allocation6 + $0x38] sm:$0xf]
    %v97 = vld [vmem:[#allocation6 + $0x3c] sm:$0xf]
    %v98 = vld [vmem:[#allocation6 + $0x40] sm:$0xf]
    %v99 = vld [vmem:[#allocation6 + $0x44] sm:$0xf]
    %v100 = vld [vmem:[#allocation6 + $0x48] sm:$0xf]
    %v101 = vld [vmem:[#allocation6 + $0x4c] sm:$0xf]
    %v102 = vld [vmem:[#allocation6 + $0x50] sm:$0xf]
    %v103 = vld [vmem:[#allocation6 + $0x54] sm:$0xf]
    %v104 = vld [vmem:[#allocation6 + $0x58] sm:$0xf]
    %v105 = vld [vmem:[#allocation6 + $0x5c] sm:$0xf]
    %v106 = vld [vmem:[#allocation6 + $0x60] sm:$0xf]
    %v107 = vld [vmem:[#allocation6 + $0x64] sm:$0xf]
    %v108 = vld [vmem:[#allocation6 + $0x68] sm:$0xf]
    %v109 = vld [vmem:[#allocation6 + $0x6c] sm:$0xf]
    %v110 = vld [vmem:[#allocation6 + $0x70] sm:$0xf]
    %v111 = vld [vmem:[#allocation6 + $0x74] sm:$0xf]
    %v112 = vld [vmem:[#allocation6 + $0x78] sm:$0xf]
    %v113 = vld [vmem:[#allocation6 + $0x7c] sm:$0xf]
    %v114 = vld [vmem:[#allocation6 + $0x80] sm:$0xf]
    %v115 = vld [vmem:[#allocation6 + $0x84] sm:$0xf]
    %v116 = vld [vmem:[#allocation6 + $0x88] sm:$0xf]
    %v117 = vld [vmem:[#allocation6 + $0x8c] sm:$0xf]
    %v118 = vld [vmem:[#allocation6 + $0x90] sm:$0xf]
    %v119 = vld [vmem:[#allocation6 + $0x94] sm:$0xf]
    %v120 = vld [vmem:[#allocation6 + $0x98] sm:$0xf]
    %v121 = vld [vmem:[#allocation6 + $0x9c] sm:$0xf]
    %v122 = vld [vmem:[#allocation6 + $0xa0] sm:$0xf]
    %v123 = vld [vmem:[#allocation6 + $0xa4] sm:$0xf]
    %v124 = vld [vmem:[#allocation6 + $0xa8] sm:$0xf]
    %v125 = vld [vmem:[#allocation6 + $0xac] sm:$0xf]
    %v126 = vld [vmem:[#allocation6 + $0xb0] sm:$0xf]
    %v127 = vld [vmem:[#allocation6 + $0xb4] sm:$0xf]
    %v128 = vld [vmem:[#allocation6 + $0xb8] sm:$0xf]
    %v129 = vld [vmem:[#allocation6 + $0xbc] sm:$0xf]
    %v130 = vld [vmem:[#allocation6 + $0xc0] sm:$0xf]
    %v131 = vld [vmem:[#allocation6 + $0xc4] sm:$0xf]
    %v132 = vld [vmem:[#allocation6 + $0xc8] sm:$0xf]
    %v133 = vld [vmem:[#allocation6 + $0xcc] sm:$0xf]
    %v134 = vld [vmem:[#allocation6 + $0xd0] sm:$0xf]
    %v135 = vld [vmem:[#allocation6 + $0xd4] sm:$0xf]
    %v136 = vld [vmem:[#allocation6 + $0xd8] sm:$0xf]
    %v137 = vld [vmem:[#allocation6 + $0xdc] sm:$0xf]
    %v138 = vld [vmem:[#allocation6 + $0xe0] sm:$0xf]
    %v139 = vld [vmem:[#allocation6 + $0xe4] sm:$0xf]
    %v140 = vld [vmem:[#allocation6 + $0xe8] sm:$0xf]
    %v141 = vld [vmem:[#allocation6 + $0xec] sm:$0xf]
    %v142 = vld [vmem:[#allocation6 + $0xf0] sm:$0xf]
    %v143 = vld [vmem:[#allocation6 + $0xf4] sm:$0xf]
    %v144 = vld [vmem:[#allocation6 + $0xf8] sm:$0xf]
    %v145 = vld [vmem:[#allocation6 + $0xfc] sm:$0xf]
    %v146 = vld [vmem:[#allocation6 + $0x100] sm:$0xf]
    %v147 = vld [vmem:[#allocation6 + $0x104] sm:$0xf]
    %v148 = vld [vmem:[#allocation6 + $0x108] sm:$0xf]
    %v149 = vld [vmem:[#allocation6 + $0x10c] sm:$0xf]
    %v150 = vld [vmem:[#allocation6 + $0x110] sm:$0xf]
    %v151 = vld [vmem:[#allocation6 + $0x114] sm:$0xf]
    %v152 = vld [vmem:[#allocation6 + $0x118] sm:$0xf]
    %v153 = vld [vmem:[#allocation6 + $0x11c] sm:$0xf]
    %v154 = vld [vmem:[#allocation6 + $0x120] sm:$0xf]
    %v155 = vld [vmem:[#allocation6 + $0x124] sm:$0xf]
    %v156 = vld [vmem:[#allocation6 + $0x128] sm:$0xf]
    %v157 = vld [vmem:[#allocation6 + $0x12c] sm:$0xf]
    %v158 = vld [vmem:[#allocation6 + $0x130] sm:$0xf]
    %v159 = vld [vmem:[#allocation6 + $0x134] sm:$0xf]
    %v160 = vld [vmem:[#allocation6 + $0x138] sm:$0xf]
    %v161 = vld [vmem:[#allocation6 + $0x13c] sm:$0xf]
    %v162 = vld [vmem:[#allocation6 + $0x140] sm:$0xf]
    %v163 = vld [vmem:[#allocation6 + $0x144] sm:$0xf]
    %v164 = vld [vmem:[#allocation6 + $0x148] sm:$0xf]
    %v165 = vld [vmem:[#allocation6 + $0x14c] sm:$0xf]
    %v166 = vld [vmem:[#allocation6 + $0x150] sm:$0xf]
    %v167 = vld [vmem:[#allocation6 + $0x154] sm:$0xf]
    %v168 = vld [vmem:[#allocation6 + $0x158] sm:$0xf]
    %v169 = vld [vmem:[#allocation6 + $0x15c] sm:$0xf]
    %v170 = vld [vmem:[#allocation6 + $0x160] sm:$0xf]
    %v171 = vld [vmem:[#allocation6 + $0x164] sm:$0xf]
    %v172 = vld [vmem:[#allocation6 + $0x168] sm:$0xf]
    %v173 = vld [vmem:[#allocation6 + $0x16c] sm:$0xf]
    %v174 = vld [vmem:[#allocation6 + $0x170] sm:$0xf]
    %v175 = vld [vmem:[#allocation6 + $0x174] sm:$0xf]
    %v176 = vld [vmem:[#allocation6 + $0x178] sm:$0xf]
    %v177 = vld [vmem:[#allocation6 + $0x17c] sm:$0xf]
    %v178 = vld [vmem:[#allocation6 + $0x180] sm:$0xf]
    %v179 = vld [vmem:[#allocation6 + $0x184] sm:$0xf]
    %v180 = vld [vmem:[#allocation6 + $0x188] sm:$0xf]
    %v181 = vld [vmem:[#allocation6 + $0x18c] sm:$0xf]
    %v182 = vld [vmem:[#allocation6 + $0x190] sm:$0xf]
    %v183 = vld [vmem:[#allocation6 + $0x194] sm:$0xf]
    %v184 = vld [vmem:[#allocation6 + $0x198] sm:$0xf]
    %v185 = vld [vmem:[#allocation6 + $0x19c] sm:$0xf]
    %v186 = vld [vmem:[#allocation6 + $0x1a0] sm:$0xf]
    %v187 = vld [vmem:[#allocation6 + $0x1a4] sm:$0xf]
    %v188 = vld [vmem:[#allocation6 + $0x1a8] sm:$0xf]
    %v189 = vld [vmem:[#allocation6 + $0x1ac] sm:$0xf]
    %v190 = vld [vmem:[#allocation6 + $0x1b0] sm:$0xf]
    %v191 = vld [vmem:[#allocation6 + $0x1b4] sm:$0xf]
    %v192 = vld [vmem:[#allocation6 + $0x1b8] sm:$0xf]
    %v193 = vld [vmem:[#allocation6 + $0x1bc] sm:$0xf]
    %v194 = vld [vmem:[#allocation6 + $0x1c0] sm:$0xf]
    %v195 = vld [vmem:[#allocation6 + $0x1c4] sm:$0xf]
    %v196 = vld [vmem:[#allocation6 + $0x1c8] sm:$0xf]
    %v197 = vld [vmem:[#allocation6 + $0x1cc] sm:$0xf]
    %v198 = vld [vmem:[#allocation6 + $0x1d0] sm:$0xf]
    %v199 = vld [vmem:[#allocation6 + $0x1d4] sm:$0xf]
    %v200 = vld [vmem:[#allocation6 + $0x1d8] sm:$0xf]
    %v201 = vld [vmem:[#allocation6 + $0x1dc] sm:$0xf]
    %v202 = vld [vmem:[#allocation6 + $0x1e0] sm:$0xf]
    %v203 = vld [vmem:[#allocation6 + $0x1e4] sm:$0xf]
    %v204 = vld [vmem:[#allocation6 + $0x1e8] sm:$0xf]
    %v205 = vld [vmem:[#allocation6 + $0x1ec] sm:$0xf]
    %v206 = vld [vmem:[#allocation6 + $0x1f0] sm:$0xf]
    %v207 = vld [vmem:[#allocation6 + $0x1f4] sm:$0xf]
    %v208 = vld [vmem:[#allocation6 + $0x1f8] sm:$0xf]
    %v209 = vld [vmem:[#allocation6 + $0x1fc] sm:$0xf]
    %v338 = vunpack.c.l.b16 %v82
    %v339 = vunpack.c.l.b16 %v83
    %v340 = vunpack.c.l.b16 %v84
    %v341 = vunpack.c.l.b16 %v85
    %v342 = vunpack.c.l.b16 %v86
    %v343 = vunpack.c.l.b16 %v87
    %v344 = vunpack.c.l.b16 %v88
    %v345 = vunpack.c.l.b16 %v89
    %v346 = vunpack.c.l.b16 %v90
    %v347 = vunpack.c.l.b16 %v91
    %v348 = vunpack.c.l.b16 %v92
    %v349 = vunpack.c.l.b16 %v93
    %v350 = vunpack.c.l.b16 %v94
    %v351 = vunpack.c.l.b16 %v95
    %v352 = vunpack.c.l.b16 %v96
    %v353 = vunpack.c.l.b16 %v97
    %v354 = vunpack.c.l.b16 %v98
    %v355 = vunpack.c.l.b16 %v99
    %v356 = vunpack.c.l.b16 %v100
    %v357 = vunpack.c.l.b16 %v101
    %v358 = vunpack.c.l.b16 %v102
    %v359 = vunpack.c.l.b16 %v103
    %v360 = vunpack.c.l.b16 %v104
    %v361 = vunpack.c.l.b16 %v105
    %v362 = vunpack.c.l.b16 %v106
    %v363 = vunpack.c.l.b16 %v107
    %v364 = vunpack.c.l.b16 %v108
    %v365 = vunpack.c.l.b16 %v109
    %v366 = vunpack.c.l.b16 %v110
    %v367 = vunpack.c.l.b16 %v111
    %v368 = vunpack.c.l.b16 %v112
    %v369 = vunpack.c.l.b16 %v113
    %v370 = vunpack.c.l.b16 %v114
    %v371 = vunpack.c.l.b16 %v115
    %v372 = vunpack.c.l.b16 %v116
    %v373 = vunpack.c.l.b16 %v117
    %v374 = vunpack.c.l.b16 %v118
    %v375 = vunpack.c.l.b16 %v119
    %v376 = vunpack.c.l.b16 %v120
    %v377 = vunpack.c.l.b16 %v121
    %v378 = vunpack.c.l.b16 %v122
    %v379 = vunpack.c.l.b16 %v123
    %v380 = vunpack.c.l.b16 %v124
    %v381 = vunpack.c.l.b16 %v125
    %v382 = vunpack.c.l.b16 %v126
    %v383 = vunpack.c.l.b16 %v127
    %v384 = vunpack.c.l.b16 %v128
    %v385 = vunpack.c.l.b16 %v129
    %v386 = vunpack.c.l.b16 %v130
    %v387 = vunpack.c.l.b16 %v131
    %v388 = vunpack.c.l.b16 %v132
    %v389 = vunpack.c.l.b16 %v133
    %v390 = vunpack.c.l.b16 %v134
    %v391 = vunpack.c.l.b16 %v135
    %v392 = vunpack.c.l.b16 %v136
    %v393 = vunpack.c.l.b16 %v137
    %v394 = vunpack.c.l.b16 %v138
    %v395 = vunpack.c.l.b16 %v139
    %v396 = vunpack.c.l.b16 %v140
    %v397 = vunpack.c.l.b16 %v141
    %v398 = vunpack.c.l.b16 %v142
    %v399 = vunpack.c.l.b16 %v143
    %v400 = vunpack.c.l.b16 %v144
    %v401 = vunpack.c.l.b16 %v145
    %v402 = vunpack.c.l.b16 %v146
    %v403 = vunpack.c.l.b16 %v147
    %v404 = vunpack.c.l.b16 %v148
    %v405 = vunpack.c.l.b16 %v149
    %v406 = vunpack.c.l.b16 %v150
    %v407 = vunpack.c.l.b16 %v151
    %v408 = vunpack.c.l.b16 %v152
    %v409 = vunpack.c.l.b16 %v153
    %v410 = vunpack.c.l.b16 %v154
    %v411 = vunpack.c.l.b16 %v155
    %v412 = vunpack.c.l.b16 %v156
    %v413 = vunpack.c.l.b16 %v157
    %v414 = vunpack.c.l.b16 %v158
    %v415 = vunpack.c.l.b16 %v159
    %v416 = vunpack.c.l.b16 %v160
    %v417 = vunpack.c.l.b16 %v161
    %v418 = vunpack.c.l.b16 %v162
    %v419 = vunpack.c.l.b16 %v163
    %v420 = vunpack.c.l.b16 %v164
    %v421 = vunpack.c.l.b16 %v165
    %v422 = vunpack.c.l.b16 %v166
    %v423 = vunpack.c.l.b16 %v167
    %v424 = vunpack.c.l.b16 %v168
    %v425 = vunpack.c.l.b16 %v169
    %v426 = vunpack.c.l.b16 %v170
    %v427 = vunpack.c.l.b16 %v171
    %v428 = vunpack.c.l.b16 %v172
    %v429 = vunpack.c.l.b16 %v173
    %v430 = vunpack.c.l.b16 %v174
    %v431 = vunpack.c.l.b16 %v175
    %v432 = vunpack.c.l.b16 %v176
    %v433 = vunpack.c.l.b16 %v177
    %v434 = vunpack.c.l.b16 %v178
    %v435 = vunpack.c.l.b16 %v179
    %v436 = vunpack.c.l.b16 %v180
    %v437 = vunpack.c.l.b16 %v181
    %v438 = vunpack.c.l.b16 %v182
    %v439 = vunpack.c.l.b16 %v183
    %v440 = vunpack.c.l.b16 %v184
    %v441 = vunpack.c.l.b16 %v185
    %v442 = vunpack.c.l.b16 %v186
    %v443 = vunpack.c.l.b16 %v187
    %v444 = vunpack.c.l.b16 %v188
    %v445 = vunpack.c.l.b16 %v189
    %v446 = vunpack.c.l.b16 %v190
    %v447 = vunpack.c.l.b16 %v191
    %v448 = vunpack.c.l.b16 %v192
    %v449 = vunpack.c.l.b16 %v193
    %v450 = vunpack.c.l.b16 %v194
    %v451 = vunpack.c.l.b16 %v195
    %v452 = vunpack.c.l.b16 %v196
    %v453 = vunpack.c.l.b16 %v197
    %v454 = vunpack.c.l.b16 %v198
    %v455 = vunpack.c.l.b16 %v199
    %v456 = vunpack.c.l.b16 %v200
    %v457 = vunpack.c.l.b16 %v201
    %v458 = vunpack.c.l.b16 %v202
    %v459 = vunpack.c.l.b16 %v203
    %v460 = vunpack.c.l.b16 %v204
    %v461 = vunpack.c.l.b16 %v205
    %v462 = vunpack.c.l.b16 %v206
    %v463 = vunpack.c.l.b16 %v207
    %v464 = vunpack.c.l.b16 %v208
    %v465 = vunpack.c.l.b16 %v209
    %v466 = vpack.c.b16 %v339, %v338
    %v467 = vpack.c.b16 %v341, %v340
    %v468 = vpack.c.b16 %v343, %v342
    %v469 = vpack.c.b16 %v345, %v344
    %v470 = vpack.c.b16 %v347, %v346
    %v471 = vpack.c.b16 %v349, %v348
    %v472 = vpack.c.b16 %v351, %v350
    %v473 = vpack.c.b16 %v353, %v352
    %v474 = vpack.c.b16 %v355, %v354
    %v475 = vpack.c.b16 %v357, %v356
    %v476 = vpack.c.b16 %v359, %v358
    %v477 = vpack.c.b16 %v361, %v360
    %v478 = vpack.c.b16 %v363, %v362
    %v479 = vpack.c.b16 %v365, %v364
    %v480 = vpack.c.b16 %v367, %v366
    %v481 = vpack.c.b16 %v369, %v368
    %v482 = vpack.c.b16 %v371, %v370
    %v483 = vpack.c.b16 %v373, %v372
    %v484 = vpack.c.b16 %v375, %v374
    %v485 = vpack.c.b16 %v377, %v376
    %v486 = vpack.c.b16 %v379, %v378
    %v487 = vpack.c.b16 %v381, %v380
    %v488 = vpack.c.b16 %v383, %v382
    %v489 = vpack.c.b16 %v385, %v384
    %v490 = vpack.c.b16 %v387, %v386
    %v491 = vpack.c.b16 %v389, %v388
    %v492 = vpack.c.b16 %v391, %v390
    %v493 = vpack.c.b16 %v393, %v392
    %v494 = vpack.c.b16 %v395, %v394
    %v495 = vpack.c.b16 %v397, %v396
    %v496 = vpack.c.b16 %v399, %v398
    %v497 = vpack.c.b16 %v401, %v400
    %v498 = vpack.c.b16 %v403, %v402
    %v499 = vpack.c.b16 %v405, %v404
    %v500 = vpack.c.b16 %v407, %v406
    %v501 = vpack.c.b16 %v409, %v408
    %v502 = vpack.c.b16 %v411, %v410
    %v503 = vpack.c.b16 %v413, %v412
    %v504 = vpack.c.b16 %v415, %v414
    %v505 = vpack.c.b16 %v417, %v416
    %v506 = vpack.c.b16 %v419, %v418
    %v507 = vpack.c.b16 %v421, %v420
    %v508 = vpack.c.b16 %v423, %v422
    %v509 = vpack.c.b16 %v425, %v424
    %v510 = vpack.c.b16 %v427, %v426
    %v511 = vpack.c.b16 %v429, %v428
    %v512 = vpack.c.b16 %v431, %v430
    %v513 = vpack.c.b16 %v433, %v432
    %v514 = vpack.c.b16 %v435, %v434
    %v515 = vpack.c.b16 %v437, %v436
    %v516 = vpack.c.b16 %v439, %v438
    %v517 = vpack.c.b16 %v441, %v440
    %v518 = vpack.c.b16 %v443, %v442
    %v519 = vpack.c.b16 %v445, %v444
    %v520 = vpack.c.b16 %v447, %v446
    %v521 = vpack.c.b16 %v449, %v448
    %v522 = vpack.c.b16 %v451, %v450
    %v523 = vpack.c.b16 %v453, %v452
    %v524 = vpack.c.b16 %v455, %v454
    %v525 = vpack.c.b16 %v457, %v456
    %v526 = vpack.c.b16 %v459, %v458
    %v527 = vpack.c.b16 %v461, %v460
    %v528 = vpack.c.b16 %v463, %v462
    %v529 = vpack.c.b16 %v465, %v464
    %594 = vmatprep.subr.bf16.mxu0 0
    %595 = vmatpush1.bf16.msra.mxu0 %v466
    %596 = vmatprep.subr.bf16.mxu0 0
    %597 = vmatpush1.bf16.msra.mxu0 %v467
    %598 = vmatprep.subr.bf16.mxu0 0
    %599 = vmatpush1.bf16.msra.mxu0 %v468
    %600 = vmatprep.subr.bf16.mxu0 0
    %601 = vmatpush1.bf16.msra.mxu0 %v469
    %602 = vmatprep.subr.bf16.mxu0 0
    %603 = vmatpush1.bf16.msra.mxu0 %v470
    %604 = vmatprep.subr.bf16.mxu0 0
    %605 = vmatpush1.bf16.msra.mxu0 %v471
    %606 = vmatprep.subr.bf16.mxu0 0
    %607 = vmatpush1.bf16.msra.mxu0 %v472
    %608 = vmatprep.subr.bf16.mxu0 0
    %609 = vmatpush1.bf16.msra.mxu0 %v473
    %610 = vmatprep.subr.bf16.mxu0 0
    %611 = vmatpush1.bf16.msra.mxu0 %v474
    %612 = vmatprep.subr.bf16.mxu0 0
    %613 = vmatpush1.bf16.msra.mxu0 %v475
    %614 = vmatprep.subr.bf16.mxu0 0
    %615 = vmatpush1.bf16.msra.mxu0 %v476
    %616 = vmatprep.subr.bf16.mxu0 0
    %617 = vmatpush1.bf16.msra.mxu0 %v477
    %618 = vmatprep.subr.bf16.mxu0 0
    %619 = vmatpush1.bf16.msra.mxu0 %v478
    %620 = vmatprep.subr.bf16.mxu0 0
    %621 = vmatpush1.bf16.msra.mxu0 %v479
    %622 = vmatprep.subr.bf16.mxu0 0
    %623 = vmatpush1.bf16.msra.mxu0 %v480
    %624 = vmatprep.subr.bf16.mxu0 0
    %625 = vmatpush1.bf16.msra.mxu0 %v481
    %626 = vmatprep.mubr.bf16.mxu0 %v75
    %627 = vmatmul.mubr.bf16.gmra.mrb[0].mxu0 %v74
    %v628 = vpop.f32.mrb[0].mxu0
    %v629 = vadd.f32 0.0, %v628
    %v630 = vpop.f32.mrb[0].mxu0
    %v631 = vpop.f32.mrb[0].mxu0
    %v632 = vadd.f32 0.0, %v631
    %v633 = vpop.f32.mrb[0].mxu0
    %634 = vdwg.mxu0
    %635 = vmatprep.subr.bf16.mxu0 0
    %636 = vmatpush1.bf16.msra.mxu0 %v482
    %637 = vmatprep.subr.bf16.mxu0 0
    %638 = vmatpush1.bf16.msra.mxu0 %v483
    %639 = vmatprep.subr.bf16.mxu0 0
    %640 = vmatpush1.bf16.msra.mxu0 %v484
    %641 = vmatprep.subr.bf16.mxu0 0
    %642 = vmatpush1.bf16.msra.mxu0 %v485
    %643 = vmatprep.subr.bf16.mxu0 0
    %644 = vmatpush1.bf16.msra.mxu0 %v486
    %645 = vmatprep.subr.bf16.mxu0 0
    %646 = vmatpush1.bf16.msra.mxu0 %v487
    %647 = vmatprep.subr.bf16.mxu0 0
    %648 = vmatpush1.bf16.msra.mxu0 %v488
    %649 = vmatprep.subr.bf16.mxu0 0
    %650 = vmatpush1.bf16.msra.mxu0 %v489
    %651 = vmatprep.subr.bf16.mxu0 0
    %652 = vmatpush1.bf16.msra.mxu0 %v490
    %653 = vmatprep.subr.bf16.mxu0 0
    %654 = vmatpush1.bf16.msra.mxu0 %v491
    %655 = vmatprep.subr.bf16.mxu0 0
    %656 = vmatpush1.bf16.msra.mxu0 %v492
    %657 = vmatprep.subr.bf16.mxu0 0
    %658 = vmatpush1.bf16.msra.mxu0 %v493
    %659 = vmatprep.subr.bf16.mxu0 0
    %660 = vmatpush1.bf16.msra.mxu0 %v494
    %661 = vmatprep.subr.bf16.mxu0 0
    %662 = vmatpush1.bf16.msra.mxu0 %v495
    %663 = vmatprep.subr.bf16.mxu0 0
    %664 = vmatpush1.bf16.msra.mxu0 %v496
    %665 = vmatprep.subr.bf16.mxu0 0
    %666 = vmatpush1.bf16.msra.mxu0 %v497
    %667 = vmatprep.mubr.bf16.mxu0 %v77
    %668 = vmatmul.mubr.bf16.gmra.mrb[0].mxu0 %v76
    %v669 = vpop.f32.mrb[0].mxu0
    %v670 = vadd.f32 %v629, %v669
    %v671 = vpop.f32.mrb[0].mxu0
    %v672 = vpop.f32.mrb[0].mxu0
    %v673 = vadd.f32 %v632, %v672
    %v674 = vpop.f32.mrb[0].mxu0
    %675 = vdwg.mxu0
    %676 = vmatprep.subr.bf16.mxu0 0
    %677 = vmatpush1.bf16.msra.mxu0 %v498
    %678 = vmatprep.subr.bf16.mxu0 0
    %679 = vmatpush1.bf16.msra.mxu0 %v499
    %680 = vmatprep.subr.bf16.mxu0 0
    %681 = vmatpush1.bf16.msra.mxu0 %v500
    %682 = vmatprep.subr.bf16.mxu0 0
    %683 = vmatpush1.bf16.msra.mxu0 %v501
    %684 = vmatprep.subr.bf16.mxu0 0
    %685 = vmatpush1.bf16.msra.mxu0 %v502
    %686 = vmatprep.subr.bf16.mxu0 0
    %687 = vmatpush1.bf16.msra.mxu0 %v503
    %688 = vmatprep.subr.bf16.mxu0 0
    %689 = vmatpush1.bf16.msra.mxu0 %v504
    %690 = vmatprep.subr.bf16.mxu0 0
    %691 = vmatpush1.bf16.msra.mxu0 %v505
    %692 = vmatprep.subr.bf16.mxu0 0
    %693 = vmatpush1.bf16.msra.mxu0 %v506
    %694 = vmatprep.subr.bf16.mxu0 0
    %695 = vmatpush1.bf16.msra.mxu0 %v507
    %696 = vmatprep.subr.bf16.mxu0 0
    %697 = vmatpush1.bf16.msra.mxu0 %v508
    %698 = vmatprep.subr.bf16.mxu0 0
    %699 = vmatpush1.bf16.msra.mxu0 %v509
    %700 = vmatprep.subr.bf16.mxu0 0
    %701 = vmatpush1.bf16.msra.mxu0 %v510
    %702 = vmatprep.subr.bf16.mxu0 0
    %703 = vmatpush1.bf16.msra.mxu0 %v511
    %704 = vmatprep.subr.bf16.mxu0 0
    %705 = vmatpush1.bf16.msra.mxu0 %v512
    %706 = vmatprep.subr.bf16.mxu0 0
    %707 = vmatpush1.bf16.msra.mxu0 %v513
    %708 = vmatprep.mubr.bf16.mxu0 %v79
    %709 = vmatmul.mubr.bf16.gmra.mrb[0].mxu0 %v78
    %v710 = vpop.f32.mrb[0].mxu0
    %v711 = vadd.f32 %v670, %v710
    %v712 = vpop.f32.mrb[0].mxu0
    %v713 = vpop.f32.mrb[0].mxu0
    %v714 = vadd.f32 %v673, %v713
    %v715 = vpop.f32.mrb[0].mxu0
    %716 = vdwg.mxu0
    %717 = vmatprep.subr.bf16.mxu0 0
    %718 = vmatpush1.bf16.msra.mxu0 %v514
    %719 = vmatprep.subr.bf16.mxu0 0
    %720 = vmatpush1.bf16.msra.mxu0 %v515
    %721 = vmatprep.subr.bf16.mxu0 0
    %722 = vmatpush1.bf16.msra.mxu0 %v516
    %723 = vmatprep.subr.bf16.mxu0 0
    %724 = vmatpush1.bf16.msra.mxu0 %v517
    %725 = vmatprep.subr.bf16.mxu0 0
    %726 = vmatpush1.bf16.msra.mxu0 %v518
    %727 = vmatprep.subr.bf16.mxu0 0
    %728 = vmatpush1.bf16.msra.mxu0 %v519
    %729 = vmatprep.subr.bf16.mxu0 0
    %730 = vmatpush1.bf16.msra.mxu0 %v520
    %731 = vmatprep.subr.bf16.mxu0 0
    %732 = vmatpush1.bf16.msra.mxu0 %v521
    %733 = vmatprep.subr.bf16.mxu0 0
    %734 = vmatpush1.bf16.msra.mxu0 %v522
    %735 = vmatprep.subr.bf16.mxu0 0
    %736 = vmatpush1.bf16.msra.mxu0 %v523
    %737 = vmatprep.subr.bf16.mxu0 0
    %738 = vmatpush1.bf16.msra.mxu0 %v524
    %739 = vmatprep.subr.bf16.mxu0 0
    %740 = vmatpush1.bf16.msra.mxu0 %v525
    %741 = vmatprep.subr.bf16.mxu0 0
    %742 = vmatpush1.bf16.msra.mxu0 %v526
    %743 = vmatprep.subr.bf16.mxu0 0
    %744 = vmatpush1.bf16.msra.mxu0 %v527
    %745 = vmatprep.subr.bf16.mxu0 0
    %746 = vmatpush1.bf16.msra.mxu0 %v528
    %747 = vmatprep.subr.bf16.mxu0 0
    %748 = vmatpush1.bf16.msra.mxu0 %v529
    %749 = vmatprep.mubr.bf16.mxu0 %v81
    %750 = vmatmul.mubr.bf16.gmra.mrb[0].mxu0 %v80
    %v751 = vpop.f32.mrb[0].mxu0
    %v752 = vadd.f32 %v711, %v751
    %v753 = vpop.f32.mrb[0].mxu0
    %v754 = vpop.f32.mrb[0].mxu0
    %v755 = vadd.f32 %v714, %v754
    %v756 = vpop.f32.mrb[0].mxu0
    %757 = vdwg.mxu0
    %v758 = vadd.f32 %v56, %v752
    %v759 = vadd.f32 %v57, %v755
    %760 = vst [vmem:[#allocation2] sm:$0xff] %v758
    %761 = vst [vmem:[#allocation2 + $0x8] sm:$0xff] %v759
    // Predicated region
    $region30: #{tpu_custom_call.1} parent=1 // pred_check
      %p762 = pneg %p50
    $region31: #{tpu_custom_call.1} parent=1 // pred_check_branch
      %764 = sbr.rel (%p762) target = $region33
    $region32: #{tpu_custom_call.1} parent=1 // pred_region
      %v765 = vld [vmem:[#allocation2] sm:$0xff]
      %v766 = vld [vmem:[#allocation2 + $0x8] sm:$0xff]
      %v767 = vld [vmem:[%s2] sm:$0x1]
      %v769 = vlaneseq
      %v770 = vshrl.u32 %v769, 7
      %v771 = vsub.s32 0, %v770
      %v772 = vrot.slane %v767, %v771
      %v774 = vadd.f32 %v765, %v772
      %v775 = vadd.f32 %v766, %v772
      %v776 = vlaneseq
      %v777 = vand.u32 %v776, 127
      %vm778 = vcmp.lt.s32.totalorder %v777, 10
      %v779 = vsel %vm778, %v774, -1e+30
      %v780 = vsel %vm778, %v775, -1e+30
      %781 = vmax.xlane.f32.xlu0 %v779
      %v782 = vpop.xlane.xlu0 %781
      %783 = vmax.xlane.f32.xlu0 %v780
      %v784 = vpop.xlane.xlu0 %783
      %v785 = vsub.f32 %v779, %v782
      %v786 = vsub.f32 %v780, %v784
      %v787 = vmul.f32 %v785, 1.442695
      %v788 = vpow.pop %v787
      %v789 = vmul.f32 %v786, 1.442695
      %v790 = vpow.pop %v789
      %v791 = vsel %vm778, %v788, 0.0
      %v792 = vsel %vm778, %v790, 0.0
      %793 = vadd.xlane.f32.xlu0 %v791
      %v794 = vpop.xlane.xlu0 %793
      %795 = vadd.xlane.f32.xlu0 %v792
      %v796 = vpop.xlane.xlu0 %795
      %v797 = vrcp.pop %v794
      %v798 = vrcp.pop %v796
      %v799 = vmul.f32 %v791, %v797
      %v800 = vmul.f32 %v792, %v798
      %801 = vst [vmem:[#allocation8] sm:$0xff] %v799
      %802 = vst [vmem:[#allocation8 + $0x8] sm:$0xff] %v800
      %v803 = vlog2.pop %v794
      %v804 = vmul.f32 %v803, 0.6931472
      %v805 = vlog2.pop %v796
      %v806 = vmul.f32 %v805, 0.6931472
      %v807 = vsub.f32 %v785, %v804
      %v808 = vsub.f32 %v786, %v806
      %v809 = vld [vmem:[%s3] sm:$0xff]
      %v810 = vld [vmem:[%s3 + $0x8] sm:$0xff]
      %811 = vset.pattern.permute.xlu0 0
      %812 = vperm.xlu0 %811, %v809
      %v813 = vpop.permute.xlu0 %812
      %814 = vset.pattern.permute.xlu0 0
      %815 = vperm.xlu0 %814, %v810
      %v816 = vpop.permute.xlu0 %815
      %vm817 = vcmp.eq.s32.totalorder %v777, %v813
      %vm818 = vcmp.eq.s32.totalorder %v777, %v816
      %v819 = vsel %vm817, 1, 0
      %v820 = vsel %vm818, 1, 0
      %v821 = vcvt.s32.f32 %v819
      %v822 = vcvt.s32.f32 %v820
      %v823 = vmul.f32 %v821, 0.875
      %v824 = vmul.f32 %v822, 0.875
      %v825 = vadd.f32 %v823, 0.0125
      %v826 = vadd.f32 %v824, 0.0125
      %v827 = vmul.f32 %v825, %v807
      %v828 = vmul.f32 %v826, %v808
      %v829 = vsel %vm778, %v827, 0.0
      %v830 = vsel %vm778, %v828, 0.0
      %831 = vadd.xlane.f32.xlu0 %v829
      %v832 = vpop.xlane.xlu0 %831
      %833 = vadd.xlane.f32.xlu0 %v830
      %v834 = vpop.xlane.xlu0 %833
      %v835 = vsub.f32 0.0, %v832
      %v836 = vsub.f32 0.0, %v834
      %837 = vst [vmem:[#allocation9] sm:$0xff] %v835
      %838 = vst [vmem:[#allocation9 + $0x8] sm:$0xff] %v836
    $region33: #{tpu_custom_call.1} parent=1 // pred_fallthru
      _
    // Predicated region
    $region34: #{tpu_custom_call.1} parent=1 // pred_check
      _
    $region35: #{tpu_custom_call.1} parent=1 // pred_check_branch
      %840 = sbr.rel (0) target = $region37
    $region36: #{tpu_custom_call.1} parent=1 // pred_region
      %s842 = ssub.s32 256, 256
      %843 = vsyncadd [#allocation5], %s842
      %s844 = sshll.u32 [#allocation8], 4
      %s845 = int_to_ptr.vmem [resolvable:$true] %s844
      %850 = dma.vmem_to_hbm [thread:$0]  %s845, 256, %s4, [#allocation5], 128, 128, 8
    $region37: #{tpu_custom_call.1} parent=1 // pred_fallthru
      _
    // Predicated region
    $region38: #{tpu_custom_call.1} parent=1 // pred_check
      _
    $region39: #{tpu_custom_call.1} parent=1 // pred_check_branch
      %852 = sbr.rel (0) target = $region41
    $region40: #{tpu_custom_call.1} parent=1 // pred_region
      %s854 = ssub.s32 256, 256
      %855 = vsyncadd [#allocation10], %s854
      %s856 = sshll.u32 [#allocation9], 4
      %s857 = int_to_ptr.vmem [resolvable:$true] %s856
      %862 = dma.vmem_to_hbm [thread:$0]  %s857, 256, %s5, [#allocation10], 128, 128, 8
    $region41: #{tpu_custom_call.1} parent=1 // pred_fallthru
      _
    // Predicated region
    $region42: #{tpu_custom_call.1} parent=1 // pred_check
      _
    $region43: #{tpu_custom_call.1} parent=1 // pred_check_branch
      %864 = sbr.rel (0) target = $region45
    $region44: #{tpu_custom_call.1} parent=1 // pred_region
      %865 = dma.done [#allocation5], 256
    $region45: #{tpu_custom_call.1} parent=1 // pred_fallthru
      _
    // Predicated region
    $region46: #{tpu_custom_call.1} parent=1 // pred_check
      _
    $region47: #{tpu_custom_call.1} parent=1 // pred_check_branch
      %867 = sbr.rel (0) target = $region49
    $region48: #{tpu_custom_call.1} parent=1 // pred_region
      %868 = dma.done [#allocation10], 256
    $region49: #{tpu_custom_call.1} parent=1 // pred_fallthru
      _
    %869 = vsyncpa [#allocation4], 1
    %870 = vsyncpa [#allocation7], 1
    %871 = vsyncpa [#allocation5], 1
    %872 = vsyncpa [#allocation10], 1

</llo_original>
